<compile_context>
chip_gen: v6e
topology: v6e:2x2x1
jax: 0.10.0
libtpu: 0.0.40
codegen_flags: <defaults>
</compile_context>

<pallas_src>
import functools

import jax
import jax.numpy as jnp
from jax.experimental import pallas as pl
from jax.experimental.pallas import tpu as pltpu

LANES = 128
TILE_ROWS = 1024  # 1024 x 128 f32 = 512 KiB per input block (roofline sweet spot)


def _round_up(x, m):
    return ((x + m - 1) // m) * m


def _partial_kernel(rec_ref, trs_ref, psum_ref, *, rows_total, tile_rows, need_mask):
    rec = rec_ref[...].astype(jnp.float32)
    trs = trs_ref[...].astype(jnp.float32)
    val = rec * rec - 2.0 * trs
    if need_mask:
        # Only matters on the last, partial tile; cheap VPU work in a
        # memory-bound kernel.  Rows past the true extent contribute 0.
        i = pl.program_id(0)
        row_ids = i * tile_rows + jax.lax.broadcasted_iota(jnp.int32, val.shape, 0)
        val = jnp.where(row_ids < rows_total, val, 0.0)
    # Fold (tile_rows, 128) -> (8, 128): pure elementwise vreg adds (the
    # reshape maps exactly onto the native (8,128) vreg tiles).
    psum_ref[...] = val.reshape(tile_rows // 8, 8, LANES).sum(axis=0)


def recover_bls_loss(y_rec, y_trs, *, tile_rows=TILE_ROWS):
    assert y_rec.shape == y_trs.shape, "y_rec and y_trs must have same shape"
    total_n = int(y_rec.size)

    rec_flat = jnp.ravel(y_rec)
    trs_flat = jnp.ravel(y_trs)
    # Rare fallback: pad by < 128 elements so the free reshape to (rows, 128)
    # is valid.  Padded zeros contribute 0 to the sum, so this is exact.
    rem = total_n % LANES
    if rem:
        pad = LANES - rem
        rec_flat = jnp.pad(rec_flat, (0, pad))
        trs_flat = jnp.pad(trs_flat, (0, pad))
    rows = rec_flat.shape[0] // LANES
    rec2d = rec_flat.reshape(rows, LANES)
    trs2d = trs_flat.reshape(rows, LANES)

    # Clamp the tile to the (sublane-rounded) row count so small inputs run as
    # a single grid step; keep it a multiple of 8 sublanes.
    t = min(tile_rows, _round_up(rows, 8))
    num_tiles = (rows + t - 1) // t
    need_mask = (rows % t) != 0  # static: skip masking when tiles divide evenly

    kernel = functools.partial(
        _partial_kernel, rows_total=rows, tile_rows=t, need_mask=need_mask
    )

    partials = pl.pallas_call(
        kernel,
        out_shape=jax.ShapeDtypeStruct((num_tiles * 8, LANES), jnp.float32),
        grid=(num_tiles,),
        in_specs=[
            pl.BlockSpec((t, LANES), lambda i: (i, 0)),
            pl.BlockSpec((t, LANES), lambda i: (i, 0)),
        ],
        out_specs=pl.BlockSpec((8, LANES), lambda i: (i, 0)),
        compiler_params=pltpu.CompilerParams(
            dimension_semantics=("parallel",),
        ),
    )(rec2d, trs2d)

    # Tiny final reduction (output is ~0.4% of the input bytes) done by XLA.
    return jnp.abs(jnp.sum(partials) / jnp.float32(total_n))


if __name__ == "__main__":
    key = jax.random.PRNGKey(0)
    k1, k2 = jax.random.split(key)
    # Shapes consistent with an image-recovery loss: NCHW (2, 4, 16, 16)
    y_rec = jax.random.normal(k1, (2, 4, 16, 16), dtype=jnp.float32)
    y_trs = jax.random.normal(k2, (2, 4, 16, 16), dtype=jnp.float32)

    loss = recover_bls_loss(y_rec, y_trs)
    jax.block_until_ready(loss)

    # Pure-JAX reference check
    ref = jnp.abs(jnp.mean(y_rec**2 - 2.0 * y_trs))
    assert jnp.allclose(loss, ref, rtol=1e-5, atol=1e-6), (loss, ref)

    print("KERNEL_OK")
</pallas_src>

<mosaic_0001>
module attributes {stable_mosaic.version = 11 : i64} {
  func.func @_partial_kernel(%arg0: i32, %arg1: memref<16x128xf32, #tpu.memory_space<vmem>>, %arg2: memref<16x128xf32, #tpu.memory_space<vmem>>, %arg3: memref<8x128xf32, #tpu.memory_space<vmem>>) attributes {dimension_semantics = [#tpu.dimension_semantics<parallel>], iteration_bounds = array<i64: 1>, scalar_prefetch = 0 : i64, scratch_operands = 0 : i64, tpu.core_type = #tpu.core_type<tc>, window_params = [{transform_indices = @transform_0, window_bounds = array<i64: 16, 128>}, {transform_indices = @transform_1, window_bounds = array<i64: 16, 128>}, {transform_indices = @transform_2, window_bounds = array<i64: 8, 128>}]} {
    %c0 = arith.constant 0 : index
    %c0_0 = arith.constant 0 : index
    %0 = vector.load %arg1[%c0, %c0_0] : memref<16x128xf32, #tpu.memory_space<vmem>>, vector<16x128xf32>
    %c0_1 = arith.constant 0 : index
    %c0_2 = arith.constant 0 : index
    %1 = vector.load %arg2[%c0_1, %c0_2] : memref<16x128xf32, #tpu.memory_space<vmem>>, vector<16x128xf32>
    %2 = arith.mulf %0, %0 : vector<16x128xf32>
    %cst = arith.constant 2.000000e+00 : f32
    %3 = vector.broadcast %cst : f32 to vector<16x128xf32>
    %4 = arith.mulf %3, %1 : vector<16x128xf32>
    %5 = arith.subf %2, %4 : vector<16x128xf32>
    %6 = vector.shape_cast %5 : vector<16x128xf32> to vector<2x8x128xf32>
    %cst_3 = arith.constant dense<0.000000e+00> : vector<8x128xf32>
    %7 = vector.multi_reduction <add>, %6, %cst_3 [0] : vector<2x8x128xf32> to vector<8x128xf32>
    %c0_4 = arith.constant 0 : index
    %c0_5 = arith.constant 0 : index
    %8 = vector.load %arg3[%c0_4, %c0_5] : memref<8x128xf32, #tpu.memory_space<vmem>>, vector<8x128xf32>
    tpu.vector_store %arg3[%c0_4, %c0_5], %7 {strides = array<i32>} : memref<8x128xf32, #tpu.memory_space<vmem>>, vector<8x128xf32>,
    return
  }
  func.func @transform_0(%arg0: i32) -> (i32, i32) {
    %c0_i32 = arith.constant 0 : i32
    %c0_i32_0 = arith.constant 0 : i32
    return %arg0, %c0_i32 : i32, i32
  }
  func.func @transform_1(%arg0: i32) -> (i32, i32) {
    %c0_i32 = arith.constant 0 : i32
    %c0_i32_0 = arith.constant 0 : i32
    return %arg0, %c0_i32 : i32, i32
  }
  func.func @transform_2(%arg0: i32) -> (i32, i32) {
    %c0_i32 = arith.constant 0 : i32
    %c0_i32_0 = arith.constant 0 : i32
    return %arg0, %c0_i32 : i32, i32
  }
}

</mosaic_0001>

<llo_original>
// kernel: tpu_custom_call.1
$region0: #{tpu_custom_call.1}
  #allocation0 [shape = 'u32[]', space=smem, size = 0x4, offset = 0x4, fixed_abs, tag = 'smem constant byte address 0x4 - core index']
  #allocation1 [shape = 'u32[144,128]{1,0:T(1,128)}', space=vmem, size = 0x12000, scoped, tag = 'internal scratch']
  %s0 = inlined_call_operand.hbm [shape: f32[16,128], index: 0, kind: input, shape index: {}]
  %s1 = inlined_call_operand.hbm [shape: f32[16,128], index: 1, kind: input, shape index: {}]
  %s2 = inlined_call_operand.hbm [shape: f32[8,128], index: 2, kind: output, shape index: {}]
  %s3 = sld [smem:[#allocation0]]
  $region26: #{tpu_custom_call.1} parent=0
    _
  %s5 = ssub.s32 1, %s3
  %s6 = scalar_select 0, %s5, %s3
  $region1: #{tpu_custom_call.1} parent=0
    #allocation2 [shape = 'u8[8192]{0}', space=vmem, size = 0x2000, scoped, tag = 'input window, operand 0, single buffered']
    #allocation3 [shape = 's32[1]{0}', space=sflag, size = 0x4, scoped, tag = 'scoped memory for tpu_custom_call.1']
    #allocation4 [shape = 's32[1]{0}', space=sflag, size = 0x4, scoped, tag = 'scoped memory for tpu_custom_call.1']
    #allocation5 [shape = 'u8[8192]{0}', space=vmem, size = 0x2000, scoped, tag = 'input window, operand 1, single buffered']
    #allocation6 [shape = 's32[1]{0}', space=sflag, size = 0x4, scoped, tag = 'scoped memory for tpu_custom_call.1']
    #allocation7 [shape = 'u8[4096]{0}', space=vmem, size = 0x1000, scoped, tag = 'output window, operand 0, single buffered']
    %7 = vsyncpa [#allocation3], 0
    %8 = vsyncpa [#allocation6], 0
    %9 = vsyncpa [#allocation4], 0
    // Predicated region
    $region2: #{tpu_custom_call.1} parent=1 // pred_check
      _
    $region3: #{tpu_custom_call.1} parent=1 // pred_check_branch
      %11 = sbr.rel (0) target = $region5
    $region4: #{tpu_custom_call.1} parent=1 // pred_region
      %s13 = ssub.s32 256, 256
      %14 = vsyncadd [#allocation3], %s13
      %s15 = sshll.u32 [#allocation2], 4
      %s16 = int_to_ptr.vmem [resolvable:$true] %s15
      %21 = dma.hbm_to_vmem [thread:$0]  %s0, 256, %s16, [#allocation3], 128, 128, 8
    $region5: #{tpu_custom_call.1} parent=1 // pred_fallthru
      _
    // Predicated region
    $region6: #{tpu_custom_call.1} parent=1 // pred_check
      _
    $region7: #{tpu_custom_call.1} parent=1 // pred_check_branch
      %23 = sbr.rel (0) target = $region9
    $region8: #{tpu_custom_call.1} parent=1 // pred_region
      %s25 = ssub.s32 256, 256
      %26 = vsyncadd [#allocation6], %s25
      %s27 = sshll.u32 [#allocation5], 4
      %s28 = int_to_ptr.vmem [resolvable:$true] %s27
      %33 = dma.hbm_to_vmem [thread:$0]  %s1, 256, %s28, [#allocation6], 128, 128, 8
    $region9: #{tpu_custom_call.1} parent=1 // pred_fallthru
      _
    // Predicated region
    $region10: #{tpu_custom_call.1} parent=1 // pred_check
      _
    $region11: #{tpu_custom_call.1} parent=1 // pred_check_branch
      %35 = sbr.rel (0) target = $region13
    $region12: #{tpu_custom_call.1} parent=1 // pred_region
      %36 = dma.done [#allocation3], 256
    $region13: #{tpu_custom_call.1} parent=1 // pred_fallthru
      _
    // Predicated region
    $region14: #{tpu_custom_call.1} parent=1 // pred_check
      _
    $region15: #{tpu_custom_call.1} parent=1 // pred_check_branch
      %38 = sbr.rel (0) target = $region17
    $region16: #{tpu_custom_call.1} parent=1 // pred_region
      %39 = dma.done [#allocation6], 256
    $region17: #{tpu_custom_call.1} parent=1 // pred_fallthru
      _
    %v40 = vld [vmem:[#allocation2] sm:$0xff]
    %v41 = vld [vmem:[#allocation2 + $0x8] sm:$0xff]
    %v42 = vld [vmem:[#allocation5] sm:$0xff]
    %v43 = vld [vmem:[#allocation5 + $0x8] sm:$0xff]
    %v44 = vmul.f32 %v40, %v40
    %v45 = vmul.f32 %v41, %v41
    %v46 = vmul.f32 %v42, 2.0
    %v47 = vmul.f32 %v43, 2.0
    %v48 = vsub.f32 %v44, %v46
    %v49 = vsub.f32 %v45, %v47
    %v50 = vadd.f32 %v48, %v49
    %51 = vst [vmem:[#allocation7] sm:$0xff] %v50
    // Predicated region
    $region18: #{tpu_custom_call.1} parent=1 // pred_check
      _
    $region19: #{tpu_custom_call.1} parent=1 // pred_check_branch
      %53 = sbr.rel (0) target = $region21
    $region20: #{tpu_custom_call.1} parent=1 // pred_region
      %s55 = ssub.s32 128, 128
      %56 = vsyncadd [#allocation4], %s55
      %s58 = sshll.u32 [#allocation7], 4
      %s59 = int_to_ptr.vmem [resolvable:$true] %s58
      %61 = dma.vmem_to_hbm [thread:$0]  %s59, 128, %s2, [#allocation4]
    $region21: #{tpu_custom_call.1} parent=1 // pred_fallthru
      _
    // Predicated region
    $region22: #{tpu_custom_call.1} parent=1 // pred_check
      _
    $region23: #{tpu_custom_call.1} parent=1 // pred_check_branch
      %63 = sbr.rel (0) target = $region25
    $region24: #{tpu_custom_call.1} parent=1 // pred_region
      %64 = dma.done [#allocation4], 128
    $region25: #{tpu_custom_call.1} parent=1 // pred_fallthru
      _
    %65 = vsyncpa [#allocation3], 1
    %66 = vsyncpa [#allocation6], 1
    %67 = vsyncpa [#allocation4], 1

</llo_original>
